<compile_context>
chip_gen: v5e
topology: v5e:2x2
jax: 0.10.0
libtpu: 0.0.40
codegen_flags: <defaults>
</compile_context>

<pallas_src>
import jax
import jax.numpy as jnp
from jax.experimental import pallas as pl
from jax.experimental.pallas import tpu as pltpu


def _fused_mlp_kernel(x_ref, w_ref, b_ref, o_ref):
    # In-kernel bf16 cast of the activation (avoids a wrapper HBM pass over x).
    x = x_ref[...].astype(w_ref.dtype)
    acc = jnp.dot(x, w_ref[...], preferred_element_type=jnp.float32)
    o_ref[...] = (acc + b_ref[...]).astype(o_ref.dtype)  # bias add stays f32


def prepare_fused_params(w_emb, b_emb, w_h1, b_h1, w_h2, b_h2, *, use_bf16=True):
    """Fold emb + both heads into one affine map. Run ONCE at load time.

    Weights are in PyTorch nn.Linear layout ([out_features, in_features]).
    Returns (W_fused [in_dim, 2*out_dim] bf16, b_fused [1, 2*out_dim] f32).
    """
    f32 = jnp.float32
    w_heads = jnp.concatenate([w_h1, w_h2], axis=0).astype(f32)   # [2*out, emb]
    w_fused = w_emb.astype(f32).T @ w_heads.T                     # [in, 2*out]
    b_fused = (b_emb.astype(f32) @ w_heads.T
               + jnp.concatenate([b_h1, b_h2], axis=0).astype(f32))
    cdt = jnp.bfloat16 if use_bf16 else f32
    return w_fused.astype(cdt), b_fused.reshape(1, -1).astype(f32)


def _round_up(x, m):
    return ((x + m - 1) // m) * m


def _choose_block_rows(batch, bm):
    """Batch-tile rows: multiple of 16 (bf16 sublane pack), large for the HBM
    roofline, and >= 2 tiles when the batch allows (v7x megacore sharding)."""
    bm = max(16, _round_up(bm, 16))
    if batch > bm:
        return bm                       # grid >= 2 automatically
    if batch >= 32:
        half = _round_up(pl.cdiv(batch, 2), 16)
        if half < batch:
            return half                 # gives the "parallel" axis 2 tiles
    return batch                        # single full-array block (any batch ok)


def mlp_two_head_apply(x, w_fused, b_fused, *, bm=512, out_dtype=None):
    """Per-call path: one streaming matmul over x. Returns [out1, out2]."""
    B, in_dim = x.shape
    n_fused = w_fused.shape[1]
    out_dim = n_fused // 2
    out_dtype = x.dtype if out_dtype is None else jnp.dtype(out_dtype)

    bm_eff = _choose_block_rows(B, bm)
    grid = (pl.cdiv(B, bm_eff),)        # ragged last block is masked by Pallas

    out_isz = jnp.dtype(out_dtype).itemsize
    w_bytes = w_fused.size * w_fused.dtype.itemsize
    b_bytes = b_fused.size * b_fused.dtype.itemsize
    x_bytes = B * in_dim * x.dtype.itemsize
    o_bytes = B * n_fused * out_isz
    cost = pl.CostEstimate(flops=2 * B * in_dim * n_fused, transcendentals=0,
                           bytes_accessed=x_bytes + w_bytes + b_bytes + o_bytes)

    # Scoped-VMEM budget: double-buffered x/out tiles + (worst-case double-
    # buffered) weights + the f32 accumulator, with 2x headroom. Re-derive
    # before scaling dims (v7x: 64 MiB physical; v5e default scoped: 16 MiB).
    vmem_need = (2 * bm_eff * in_dim * x.dtype.itemsize
                 + 2 * bm_eff * n_fused * out_isz
                 + 2 * (w_bytes + b_bytes)
                 + bm_eff * n_fused * 4)
    vmem_limit = int(min(64 << 20, max(16 << 20, 2 * vmem_need)))

    def run(single_buffer_weights):
        def invariant(shape):
            idx = lambda i: (0,) * len(shape)
            if single_buffer_weights:
                # Grid-invariant weights: one buffer is enough (halves VMEM).
                return pl.BlockSpec(shape, idx, pipeline_mode=pl.Buffered(1))
            return pl.BlockSpec(shape, idx)

        return pl.pallas_call(
            _fused_mlp_kernel,
            grid=grid,
            in_specs=[
                pl.BlockSpec((bm_eff, in_dim), lambda i: (i, 0)),   # x batch tile
                invariant((in_dim, n_fused)),                       # W_fused
                invariant((1, n_fused)),                            # b_fused
            ],
            out_specs=pl.BlockSpec((bm_eff, n_fused), lambda i: (i, 0)),
            out_shape=jax.ShapeDtypeStruct((B, n_fused), out_dtype),
            compiler_params=pltpu.CompilerParams(
                dimension_semantics=("parallel",),
                vmem_limit_bytes=vmem_limit),
            cost_estimate=cost,
        )(x, w_fused, b_fused)

    try:
        fused = run(single_buffer_weights=True)
        jax.block_until_ready(fused)
    except Exception:
        # Fallback for JAX versions without BlockSpec pipeline_mode / Buffered(1).
        fused = run(single_buffer_weights=False)

    return [fused[:, :out_dim], fused[:, out_dim:]]


if __name__ == "__main__":
    # Small shapes consistent with the module; B=10 exercises the full-array
    # single-block path, B=96 exercises a 2-tile "parallel" grid.
    B, in_dim, emb_dim, out_dim = 10, 32, 64, 16
    f32 = jnp.float32

    key = jax.random.PRNGKey(0)
    kx, k0, k1, k2, k3, k4, k5 = jax.random.split(key, 7)
    # PyTorch nn.Linear layout: weight is [out_features, in_features].
    w_emb = jax.random.normal(k0, (emb_dim, in_dim), f32) * 0.1
    b_emb = jax.random.normal(k1, (emb_dim,), f32) * 0.1
    w_h1 = jax.random.normal(k2, (out_dim, emb_dim), f32) * 0.1
    b_h1 = jax.random.normal(k3, (out_dim,), f32) * 0.1
    w_h2 = jax.random.normal(k4, (out_dim, emb_dim), f32) * 0.1
    b_h2 = jax.random.normal(k5, (out_dim,), f32) * 0.1

    # One-time prep (frozen constants at inference time).
    w_fused, b_fused = prepare_fused_params(w_emb, b_emb, w_h1, b_h1, w_h2, b_h2)

    def ref_exact(xa):
        z = xa @ w_emb.T + b_emb
        return z @ w_h1.T + b_h1, z @ w_h2.T + b_h2

    def ref_bf16(xa):
        # Mirrors the kernel math: bf16 inputs, f32 accumulate, f32 bias.
        xb = xa.astype(jnp.bfloat16).astype(f32)
        wb = w_fused.astype(f32)
        o = xb @ wb + b_fused[0]
        return o[:, :out_dim], o[:, out_dim:]

    for nb in (B, 96):
        x = jax.random.normal(jax.random.fold_in(kx, nb), (nb, in_dim), f32)
        out1, out2 = mlp_two_head_apply(x, w_fused, b_fused)
        jax.block_until_ready((out1, out2))

        assert out1.shape == (nb, out_dim) and out2.shape == (nb, out_dim)
        r1b, r2b = ref_bf16(x)
        assert jnp.allclose(out1, r1b, atol=1e-4, rtol=1e-4)
        assert jnp.allclose(out2, r2b, atol=1e-4, rtol=1e-4)
        # Against the exact f32 PyTorch math: only a single bf16 rounding of
        # x and of the fused weight separates the two.
        r1, r2 = ref_exact(x)
        assert jnp.allclose(out1, r1, atol=5e-2, rtol=5e-2)
        assert jnp.allclose(out2, r2, atol=5e-2, rtol=5e-2)

    print("KERNEL_OK")
</pallas_src>

<mosaic_0001>
module attributes {stable_mosaic.version = 11 : i64} {
  func.func @_fused_mlp_kernel(%arg0: i32, %arg1: memref<10x32xf32, #tpu.memory_space<vmem>>, %arg2: memref<32x32xbf16, #tpu.memory_space<vmem>>, %arg3: memref<1x32xf32, #tpu.memory_space<vmem>>, %arg4: memref<10x32xf32, #tpu.memory_space<vmem>>) attributes {dimension_semantics = [#tpu.dimension_semantics<parallel>], iteration_bounds = array<i64: 1>, scalar_prefetch = 0 : i64, scratch_operands = 0 : i64, tpu.core_type = #tpu.core_type<tc>, window_params = [{transform_indices = @transform_0, window_bounds = array<i64: 10, 32>}, {pipeline_mode = #tpu.pipeline_mode<synchronous>, transform_indices = @transform_1, window_bounds = array<i64: 32, 32>}, {pipeline_mode = #tpu.pipeline_mode<synchronous>, transform_indices = @transform_2, window_bounds = array<i64: 1, 32>}, {transform_indices = @transform_3, window_bounds = array<i64: 10, 32>}]} {
    %c0 = arith.constant 0 : index
    %c0_0 = arith.constant 0 : index
    %0 = vector.load %arg1[%c0, %c0_0] : memref<10x32xf32, #tpu.memory_space<vmem>>, vector<10x32xf32>
    %1 = arith.truncf %0 : vector<10x32xf32> to vector<10x32xbf16>
    %c0_1 = arith.constant 0 : index
    %c0_2 = arith.constant 0 : index
    %2 = vector.load %arg2[%c0_1, %c0_2] : memref<32x32xbf16, #tpu.memory_space<vmem>>, vector<32x32xbf16>
    %cst = arith.constant dense<0.000000e+00> : vector<10x32xf32>
    %3 = tpu.matmul %1, %2, %cst {dimension_numbers = #tpu.dot_dimension_numbers<[1], [0], [0], [1], [0, 0, 1, 1], [], []>} : vector<10x32xbf16>, vector<32x32xbf16>, vector<10x32xf32> -> vector<10x32xf32>
    %c0_3 = arith.constant 0 : index
    %c0_4 = arith.constant 0 : index
    %4 = vector.load %arg3[%c0_3, %c0_4] : memref<1x32xf32, #tpu.memory_space<vmem>>, vector<1x32xf32>
    %5 = vector.broadcast %4 : vector<1x32xf32> to vector<10x32xf32>
    %6 = arith.addf %3, %5 : vector<10x32xf32>
    %c0_5 = arith.constant 0 : index
    %c0_6 = arith.constant 0 : index
    %7 = vector.load %arg4[%c0_5, %c0_6] : memref<10x32xf32, #tpu.memory_space<vmem>>, vector<10x32xf32>
    tpu.vector_store %arg4[%c0_5, %c0_6], %6 {strides = array<i32>} : memref<10x32xf32, #tpu.memory_space<vmem>>, vector<10x32xf32>,
    return
  }
  func.func @transform_0(%arg0: i32) -> (i32, i32) {
    %c0_i32 = arith.constant 0 : i32
    %c0_i32_0 = arith.constant 0 : i32
    return %arg0, %c0_i32 : i32, i32
  }
  func.func @transform_1(%arg0: i32) -> (i32, i32) {
    %c0_i32 = arith.constant 0 : i32
    %c0_i32_0 = arith.constant 0 : i32
    %c0_i32_1 = arith.constant 0 : i32
    return %c0_i32, %c0_i32_0 : i32, i32
  }
  func.func @transform_2(%arg0: i32) -> (i32, i32) {
    %c0_i32 = arith.constant 0 : i32
    %c0_i32_0 = arith.constant 0 : i32
    %c0_i32_1 = arith.constant 0 : i32
    return %c0_i32, %c0_i32_0 : i32, i32
  }
  func.func @transform_3(%arg0: i32) -> (i32, i32) {
    %c0_i32 = arith.constant 0 : i32
    %c0_i32_0 = arith.constant 0 : i32
    return %arg0, %c0_i32 : i32, i32
  }
}

module attributes {stable_mosaic.version = 11 : i64} {
  func.func @_fused_mlp_kernel(%arg0: i32, %arg1: memref<10x32xf32, #tpu.memory_space<vmem>>, %arg2: memref<32x32xbf16, #tpu.memory_space<vmem>>, %arg3: memref<1x32xf32, #tpu.memory_space<vmem>>, %arg4: memref<10x32xf32, #tpu.memory_space<vmem>>) attributes {dimension_semantics = [#tpu.dimension_semantics<parallel>], iteration_bounds = array<i64: 1>, scalar_prefetch = 0 : i64, scratch_operands = 0 : i64, tpu.core_type = #tpu.core_type<tc>, window_params = [{transform_indices = @transform_0, window_bounds = array<i64: 10, 32>}, {pipeline_mode = #tpu.pipeline_mode<synchronous>, transform_indices = @transform_1, window_bounds = array<i64: 32, 32>}, {pipeline_mode = #tpu.pipeline_mode<synchronous>, transform_indices = @transform_2, window_bounds = array<i64: 1, 32>}, {transform_indices = @transform_3, window_bounds = array<i64: 10, 32>}]} {
    %c0 = arith.constant 0 : index
    %c0_0 = arith.constant 0 : index
    %0 = vector.load %arg1[%c0, %c0_0] : memref<10x32xf32, #tpu.memory_space<vmem>>, vector<10x32xf32>
    %1 = arith.truncf %0 : vector<10x32xf32> to vector<10x32xbf16>
    %c0_1 = arith.constant 0 : index
    %c0_2 = arith.constant 0 : index
    %2 = vector.load %arg2[%c0_1, %c0_2] : memref<32x32xbf16, #tpu.memory_space<vmem>>, vector<32x32xbf16>
    %cst = arith.constant dense<0.000000e+00> : vector<10x32xf32>
    %3 = tpu.matmul %1, %2, %cst {dimension_numbers = #tpu.dot_dimension_numbers<[1], [0], [0], [1], [0, 0, 1, 1], [], []>} : vector<10x32xbf16>, vector<32x32xbf16>, vector<10x32xf32> -> vector<10x32xf32>
    %c0_3 = arith.constant 0 : index
    %c0_4 = arith.constant 0 : index
    %4 = vector.load %arg3[%c0_3, %c0_4] : memref<1x32xf32, #tpu.memory_space<vmem>>, vector<1x32xf32>
    %5 = vector.broadcast %4 : vector<1x32xf32> to vector<10x32xf32>
    %6 = arith.addf %3, %5 : vector<10x32xf32>
    %c0_5 = arith.constant 0 : index
    %c0_6 = arith.constant 0 : index
    %7 = vector.load %arg4[%c0_5, %c0_6] : memref<10x32xf32, #tpu.memory_space<vmem>>, vector<10x32xf32>
    tpu.vector_store %arg4[%c0_5, %c0_6], %6 {strides = array<i32>} : memref<10x32xf32, #tpu.memory_space<vmem>>, vector<10x32xf32>,
    return
  }
  func.func @transform_0(%arg0: i32) -> (i32, i32) {
    %c0_i32 = arith.constant 0 : i32
    %c0_i32_0 = arith.constant 0 : i32
    return %arg0, %c0_i32 : i32, i32
  }
  func.func @transform_1(%arg0: i32) -> (i32, i32) {
    %c0_i32 = arith.constant 0 : i32
    %c0_i32_0 = arith.constant 0 : i32
    %c0_i32_1 = arith.constant 0 : i32
    return %c0_i32, %c0_i32_0 : i32, i32
  }
  func.func @transform_2(%arg0: i32) -> (i32, i32) {
    %c0_i32 = arith.constant 0 : i32
    %c0_i32_0 = arith.constant 0 : i32
    %c0_i32_1 = arith.constant 0 : i32
    return %c0_i32, %c0_i32_0 : i32, i32
  }
  func.func @transform_3(%arg0: i32) -> (i32, i32) {
    %c0_i32 = arith.constant 0 : i32
    %c0_i32_0 = arith.constant 0 : i32
    return %arg0, %c0_i32 : i32, i32
  }
}

</mosaic_0001>

<llo_original>
// kernel: tpu_custom_call.1
$region0: #{tpu_custom_call.1}
  #allocation0 [shape = 'u32[]', space=smem, size = 0x4, offset = 0x4, fixed_abs, tag = 'smem constant byte address 0x4 - core index']
  #allocation1 [shape = 'u32[72,128]{1,0:T(1,128)}', space=vmem, size = 0x9000, scoped, tag = 'internal scratch']
  %s0 = inlined_call_operand.hbm [shape: f32[10,32], index: 0, kind: input, shape index: {}]
  %s1 = inlined_call_operand.hbm [shape: bf16[32,32], index: 1, kind: input, shape index: {}]
  %s2 = inlined_call_operand.vmem [shape: f32[1,32], index: 2, kind: input, shape index: {}]
  %s3 = inlined_call_operand.hbm [shape: f32[10,32], index: 3, kind: output, shape index: {}]
  %s4 = sld [smem:[#allocation0]]
  $region30: #{tpu_custom_call.1} parent=0
    _
  %s6 = ssub.s32 1, %s4
  %s7 = scalar_select 0, %s6, %s4
  $region1: #{tpu_custom_call.1} parent=0
    #allocation2 [shape = 'u8[8192]{0}', space=vmem, size = 0x2000, scoped, tag = 'input window, operand 0, single buffered']
    #allocation3 [shape = 's32[1]{0}', space=sflag, size = 0x4, scoped, tag = 'scoped memory for tpu_custom_call.1']
    #allocation4 [shape = 's32[1]{0}', space=sflag, size = 0x4, scoped, tag = 'scoped memory for tpu_custom_call.1']
    #allocation5 [shape = 'u8[8192]{0}', space=vmem, size = 0x2000, scoped, tag = 'input window, operand 1, single buffered']
    #allocation6 [shape = 's32[1]{0}', space=sflag, size = 0x4, scoped, tag = 'scoped memory for tpu_custom_call.1']
    #allocation7 [shape = 'u8[8192]{0}', space=vmem, size = 0x2000, scoped, tag = 'output window, operand 0, single buffered']
    %8 = vsyncpa [#allocation3], 0
    %9 = vsyncpa [#allocation6], 0
    %10 = vsyncpa [#allocation4], 0
    // Predicated region
    $region2: #{tpu_custom_call.1} parent=1 // pred_check
      _
    $region3: #{tpu_custom_call.1} parent=1 // pred_check_branch
      %12 = sbr.rel (0) target = $region5
    $region4: #{tpu_custom_call.1} parent=1 // pred_region
      %14 = vsyncadd [#allocation3], 0
      %s15 = sshll.u32 %s0, 4
      %s16 = int_to_ptr.hbm [resolvable:$true] %s15
      %s17 = sshll.u32 [#allocation2], 4
      %s18 = int_to_ptr.vmem [resolvable:$true] %s17
      %23 = dma.hbm_to_vmem [thread:$0]  %s16, 256, %s18, [#allocation3], 128, 128, 8
    $region5: #{tpu_custom_call.1} parent=1 // pred_fallthru
      _
    // Predicated region
    $region6: #{tpu_custom_call.1} parent=1 // pred_check
      _
    $region7: #{tpu_custom_call.1} parent=1 // pred_check_branch
      %25 = sbr.rel (0) target = $region9
    $region8: #{tpu_custom_call.1} parent=1 // pred_region
      %27 = vsyncadd [#allocation6], 0
      %s28 = sshll.u32 %s1, 4
      %s29 = int_to_ptr.hbm [resolvable:$true] %s28
      %s30 = sshll.u32 [#allocation5], 4
      %s31 = int_to_ptr.vmem [resolvable:$true] %s30
      %36 = dma.hbm_to_vmem [thread:$0]  %s29, 256, %s31, [#allocation6], 64, 64, 4
    $region9: #{tpu_custom_call.1} parent=1 // pred_fallthru
      _
    // Predicated region
    $region10: #{tpu_custom_call.1} parent=1 // pred_check
      _
    $region11: #{tpu_custom_call.1} parent=1 // pred_check_branch
      %38 = sbr.rel (0) target = $region13
    $region12: #{tpu_custom_call.1} parent=1 // pred_region
      _
    $region13: #{tpu_custom_call.1} parent=1 // pred_fallthru
      _
    // Predicated region
    $region14: #{tpu_custom_call.1} parent=1 // pred_check
      _
    $region15: #{tpu_custom_call.1} parent=1 // pred_check_branch
      %40 = sbr.rel (0) target = $region17
    $region16: #{tpu_custom_call.1} parent=1 // pred_region
      %42 = dma.done [#allocation3], 256
    $region17: #{tpu_custom_call.1} parent=1 // pred_fallthru
      _
    // Predicated region
    $region18: #{tpu_custom_call.1} parent=1 // pred_check
      _
    $region19: #{tpu_custom_call.1} parent=1 // pred_check_branch
      %44 = sbr.rel (0) target = $region21
    $region20: #{tpu_custom_call.1} parent=1 // pred_region
      %46 = dma.done [#allocation6], 256
    $region21: #{tpu_custom_call.1} parent=1 // pred_fallthru
      _
    %v48 = vld [vmem:[#allocation2] sm:$0xff]
    %v49 = vld [vmem:[#allocation2 + $0x8] sm:$0x3]
    %v50 = vpack.c.bf16 %v49, %v48
    %v51 = vld [vmem:[#allocation5] sm:$0xf]
    %v52 = vld [vmem:[#allocation5 + $0x4] sm:$0xf]
    %v53 = vld [vmem:[#allocation5 + $0x8] sm:$0xf]
    %v54 = vld [vmem:[#allocation5 + $0xc] sm:$0xf]
    %v55 = vld [vmem:[%s2] sm:$0x1]
    %v57 = vperm.slane %v55, 0
    %v63 = vunpack.c.l.b16 %v51
    %v64 = vunpack.c.l.b16 %v52
    %v65 = vunpack.c.l.b16 %v53
    %v66 = vunpack.c.l.b16 %v54
    %v67 = vpack.c.b16 %v64, %v63
    %v68 = vpack.c.b16 %v66, %v65
    %vm71 = vcmask 261120
    %v73 = vsel %vm71, %v50, 0
    %75 = vmatpush.bf16.msra.mxu0 0
    %76 = vmatpush.bf16.msra.mxu0 0
    %77 = vmatpush.bf16.msra.mxu0 0
    %78 = vmatpush.bf16.msra.mxu0 0
    %79 = vmatpush.bf16.msra.mxu0 0
    %80 = vmatpush.bf16.msra.mxu0 0
    %81 = vmatpush.bf16.msra.mxu0 %v68
    %82 = vmatpush.bf16.msra.mxu0 %v67
    %83 = vmatmul.bf16.gmra.mxu0 %v73
    %v84 = vpop.f32.mrf.mxu0
    %v85 = vadd.f32 %v57, %v84
    %v86 = vpop.f32.mrf.mxu0
    %v87 = vadd.f32 %v57, %v86
    %88 = vdwg.mxu0
    %89 = vst.msk [vmem:[#allocation7] sm:$0xff] %vm71, %v85
    %vm90 = vcmask 254976
    %91 = vst.msk [vmem:[#allocation7 + $0x8] sm:$0x3] %vm90, %v87
    // Predicated region
    $region22: #{tpu_custom_call.1} parent=1 // pred_check
      _
    $region23: #{tpu_custom_call.1} parent=1 // pred_check_branch
      %93 = sbr.rel (0) target = $region25
    $region24: #{tpu_custom_call.1} parent=1 // pred_region
      %95 = vsyncadd [#allocation4], 0
      %s96 = sshll.u32 [#allocation7], 4
      %s97 = int_to_ptr.vmem [resolvable:$true] %s96
      %s98 = sshll.u32 %s3, 4
      %s99 = int_to_ptr.hbm [resolvable:$true] %s98
      %104 = dma.vmem_to_hbm [thread:$0]  %s97, 256, %s99, [#allocation4], 128, 128, 8
    $region25: #{tpu_custom_call.1} parent=1 // pred_fallthru
      _
    // Predicated region
    $region26: #{tpu_custom_call.1} parent=1 // pred_check
      _
    $region27: #{tpu_custom_call.1} parent=1 // pred_check_branch
      %106 = sbr.rel (0) target = $region29
    $region28: #{tpu_custom_call.1} parent=1 // pred_region
      %108 = dma.done [#allocation4], 256
    $region29: #{tpu_custom_call.1} parent=1 // pred_fallthru
      _
    %109 = vsyncpa [#allocation3], 1
    %110 = vsyncpa [#allocation6], 1
    %111 = vsyncpa [#allocation4], 1

// kernel: tpu_custom_call.1
$region0: #{tpu_custom_call.1}
  #allocation0 [shape = 'u32[]', space=smem, size = 0x4, offset = 0x4, fixed_abs, tag = 'smem constant byte address 0x4 - core index']
  #allocation1 [shape = 'u32[72,128]{1,0:T(1,128)}', space=vmem, size = 0x9000, scoped, tag = 'internal scratch']
  %s0 = inlined_call_operand.hbm [shape: f32[10,32], index: 0, kind: input, shape index: {}]
  %s1 = inlined_call_operand.hbm [shape: bf16[32,32], index: 1, kind: input, shape index: {}]
  %s2 = inlined_call_operand.vmem [shape: f32[1,32], index: 2, kind: input, shape index: {}]
  %s3 = inlined_call_operand.hbm [shape: f32[10,32], index: 3, kind: output, shape index: {}]
  %s4 = sld [smem:[#allocation0]]
  $region30: #{tpu_custom_call.1} parent=0
    _
  %s6 = ssub.s32 1, %s4
  %s7 = scalar_select 0, %s6, %s4
  $region1: #{tpu_custom_call.1} parent=0
    #allocation2 [shape = 'u8[8192]{0}', space=vmem, size = 0x2000, scoped, tag = 'input window, operand 0, single buffered']
    #allocation3 [shape = 's32[1]{0}', space=sflag, size = 0x4, scoped, tag = 'scoped memory for tpu_custom_call.1']
    #allocation4 [shape = 's32[1]{0}', space=sflag, size = 0x4, scoped, tag = 'scoped memory for tpu_custom_call.1']
    #allocation5 [shape = 'u8[8192]{0}', space=vmem, size = 0x2000, scoped, tag = 'input window, operand 1, single buffered']
    #allocation6 [shape = 's32[1]{0}', space=sflag, size = 0x4, scoped, tag = 'scoped memory for tpu_custom_call.1']
    #allocation7 [shape = 'u8[8192]{0}', space=vmem, size = 0x2000, scoped, tag = 'output window, operand 0, single buffered']
    %8 = vsyncpa [#allocation3], 0
    %9 = vsyncpa [#allocation6], 0
    %10 = vsyncpa [#allocation4], 0
    // Predicated region
    $region2: #{tpu_custom_call.1} parent=1 // pred_check
      _
    $region3: #{tpu_custom_call.1} parent=1 // pred_check_branch
      %12 = sbr.rel (0) target = $region5
    $region4: #{tpu_custom_call.1} parent=1 // pred_region
      %14 = vsyncadd [#allocation3], 0
      %s15 = sshll.u32 %s0, 4
      %s16 = int_to_ptr.hbm [resolvable:$true] %s15
      %s17 = sshll.u32 [#allocation2], 4
      %s18 = int_to_ptr.vmem [resolvable:$true] %s17
      %23 = dma.hbm_to_vmem [thread:$0]  %s16, 256, %s18, [#allocation3], 128, 128, 8
    $region5: #{tpu_custom_call.1} parent=1 // pred_fallthru
      _
    // Predicated region
    $region6: #{tpu_custom_call.1} parent=1 // pred_check
      _
    $region7: #{tpu_custom_call.1} parent=1 // pred_check_branch
      %25 = sbr.rel (0) target = $region9
    $region8: #{tpu_custom_call.1} parent=1 // pred_region
      %27 = vsyncadd [#allocation6], 0
      %s28 = sshll.u32 %s1, 4
      %s29 = int_to_ptr.hbm [resolvable:$true] %s28
      %s30 = sshll.u32 [#allocation5], 4
      %s31 = int_to_ptr.vmem [resolvable:$true] %s30
      %36 = dma.hbm_to_vmem [thread:$0]  %s29, 256, %s31, [#allocation6], 64, 64, 4
    $region9: #{tpu_custom_call.1} parent=1 // pred_fallthru
      _
    // Predicated region
    $region10: #{tpu_custom_call.1} parent=1 // pred_check
      _
    $region11: #{tpu_custom_call.1} parent=1 // pred_check_branch
      %38 = sbr.rel (0) target = $region13
    $region12: #{tpu_custom_call.1} parent=1 // pred_region
      _
    $region13: #{tpu_custom_call.1} parent=1 // pred_fallthru
      _
    // Predicated region
    $region14: #{tpu_custom_call.1} parent=1 // pred_check
      _
    $region15: #{tpu_custom_call.1} parent=1 // pred_check_branch
      %40 = sbr.rel (0) target = $region17
    $region16: #{tpu_custom_call.1} parent=1 // pred_region
      %42 = dma.done [#allocation3], 256
    $region17: #{tpu_custom_call.1} parent=1 // pred_fallthru
      _
    // Predicated region
    $region18: #{tpu_custom_call.1} parent=1 // pred_check
      _
    $region19: #{tpu_custom_call.1} parent=1 // pred_check_branch
      %44 = sbr.rel (0) target = $region21
    $region20: #{tpu_custom_call.1} parent=1 // pred_region
      %46 = dma.done [#allocation6], 256
    $region21: #{tpu_custom_call.1} parent=1 // pred_fallthru
      _
    %v48 = vld [vmem:[#allocation2] sm:$0xff]
    %v49 = vld [vmem:[#allocation2 + $0x8] sm:$0x3]
    %v50 = vpack.c.bf16 %v49, %v48
    %v51 = vld [vmem:[#allocation5] sm:$0xf]
    %v52 = vld [vmem:[#allocation5 + $0x4] sm:$0xf]
    %v53 = vld [vmem:[#allocation5 + $0x8] sm:$0xf]
    %v54 = vld [vmem:[#allocation5 + $0xc] sm:$0xf]
    %v55 = vld [vmem:[%s2] sm:$0x1]
    %v57 = vperm.slane %v55, 0
    %v63 = vunpack.c.l.b16 %v51
    %v64 = vunpack.c.l.b16 %v52
    %v65 = vunpack.c.l.b16 %v53
    %v66 = vunpack.c.l.b16 %v54
    %v67 = vpack.c.b16 %v64, %v63
    %v68 = vpack.c.b16 %v66, %v65
    %vm71 = vcmask 261120
    %v73 = vsel %vm71, %v50, 0
    %75 = vmatpush.bf16.msra.mxu0 0
    %76 = vmatpush.bf16.msra.mxu0 0
    %77 = vmatpush.bf16.msra.mxu0 0
    %78 = vmatpush.bf16.msra.mxu0 0
    %79 = vmatpush.bf16.msra.mxu0 0
    %80 = vmatpush.bf16.msra.mxu0 0
    %81 = vmatpush.bf16.msra.mxu0 %v68
    %82 = vmatpush.bf16.msra.mxu0 %v67
    %83 = vmatmul.bf16.gmra.mxu0 %v73
    %v84 = vpop.f32.mrf.mxu0
    %v85 = vadd.f32 %v57, %v84
    %v86 = vpop.f32.mrf.mxu0
    %v87 = vadd.f32 %v57, %v86
    %88 = vdwg.mxu0
    %89 = vst.msk [vmem:[#allocation7] sm:$0xff] %vm71, %v85
    %vm90 = vcmask 254976
    %91 = vst.msk [vmem:[#allocation7 + $0x8] sm:$0x3] %vm90, %v87
    // Predicated region
    $region22: #{tpu_custom_call.1} parent=1 // pred_check
      _
    $region23: #{tpu_custom_call.1} parent=1 // pred_check_branch
      %93 = sbr.rel (0) target = $region25
    $region24: #{tpu_custom_call.1} parent=1 // pred_region
      %95 = vsyncadd [#allocation4], 0
      %s96 = sshll.u32 [#allocation7], 4
      %s97 = int_to_ptr.vmem [resolvable:$true] %s96
      %s98 = sshll.u32 %s3, 4
      %s99 = int_to_ptr.hbm [resolvable:$true] %s98
      %104 = dma.vmem_to_hbm [thread:$0]  %s97, 256, %s99, [#allocation4], 128, 128, 8
    $region25: #{tpu_custom_call.1} parent=1 // pred_fallthru
      _
    // Predicated region
    $region26: #{tpu_custom_call.1} parent=1 // pred_check
      _
    $region27: #{tpu_custom_call.1} parent=1 // pred_check_branch
      %106 = sbr.rel (0) target = $region29
    $region28: #{tpu_custom_call.1} parent=1 // pred_region
      %108 = dma.done [#allocation4], 256
    $region29: #{tpu_custom_call.1} parent=1 // pred_fallthru
      _
    %109 = vsyncpa [#allocation3], 1
    %110 = vsyncpa [#allocation6], 1
    %111 = vsyncpa [#allocation4], 1

</llo_original>
